<compile_context>
chip_gen: v6e
topology: v6e:2x2x1
jax: 0.10.0
libtpu: 0.0.40
codegen_flags: <defaults>
</compile_context>

<pallas_src>
import jax
import jax.numpy as jnp
from jax.experimental import pallas as pl
from jax.experimental.pallas import tpu as pltpu
from jax.scipy.special import gammaln

# ---- permutect constants ----------------------------------------------------
DEPTH_CUTOFFS = (10, 20)
NUM_DEPTH_BINS = len(DEPTH_CUTOFFS) + 1          # D = 3
NUM_VARIATION_TYPES = 5                          # V = len(Variation)

_COLS = 512          # lane dim of a block (multiple of 128, lane-dense stores)
_MAX_ROWS = 512      # max sublane dim of a block -> 1 MiB f32 per array

_HALF_LOG_2PI = 0.9189385332046727               # 0.5 * log(2*pi)


# ---- lgamma: shift-by-4 recurrence + 3-term Stirling series ------------------
# Valid for x > 0.  Cost per call: 2 EUP logs + 1 approx EUP reciprocal; the
# polynomial work lives on the VALU.  For x >= 4 the shift is a no-op
# (prod replaced by 1 in the select); prod only overflows for x ~ 1e9+, and the
# resulting inf is discarded by the select, which is benign (inf, not NaN).
def _lgamma(x):
    small = x < 4.0
    y = x * x + 3.0 * x                 # x*(x+3)
    prod = y * (y + 2.0)                # == x*(x+1)*(x+2)*(x+3)
    z = jnp.where(small, x + 4.0, x)
    p = jnp.where(small, prod, 1.0)
    r = pl.reciprocal(z, approx=True)
    r2 = r * r
    series = r * (1.0 / 12.0 - r2 * (1.0 / 360.0 - r2 * (1.0 / 1260.0)))
    return (z - 0.5) * jnp.log(z) - z + _HALF_LOG_2PI + series - jnp.log(p)


# ---- Pallas kernel ----------------------------------------------------------
def _artifact_spectra_kernel(depths_ref, alts_ref, alpha_ref, beta_ref, c_ref,
                             out_ref):
    n = depths_ref[...]    # (rows, COLS) f32
    k = alts_ref[...]      # (rows, COLS) f32
    a = alpha_ref[...]     # (rows, COLS) f32, gathered in the wrapper
    b = beta_ref[...]      # (rows, COLS) f32
    c = c_ref[...]         # (rows, COLS) f32: lgamma(a+b) - lgamma(a) - lgamma(b)

    out_ref[...] = (_lgamma(k + a) + _lgamma(n - k + b) - _lgamma(n + a + b)
                    + c
                    + _lgamma(n + 1.0) - _lgamma(k + 1.0) - _lgamma(n - k + 1.0))


# ---- wrapper ----------------------------------------------------------------
@jax.jit
def artifact_spectra_forward(variant_types_b, depths_b, alt_counts_b,
                             alpha_pre_exp_dv, beta_pre_exp_dv):
    B = variant_types_b.shape[0]

    # Adaptive tiling: balanced blocks, rows a multiple of 8, at most _MAX_ROWS.
    total_rows = max(1, -(-B // _COLS))
    n_target = max(1, -(-total_rows // _MAX_ROWS))
    block_rows = min(_MAX_ROWS, ((-(-total_rows // n_target) + 7) // 8) * 8)
    n_blocks = -(-total_rows // block_rows)
    rows_pad = n_blocks * block_rows
    B_pad = rows_pad * _COLS
    pad = B_pad - B

    # Pad with depth=1 / alt=0 / type=0 -> positive lgamma arguments, no NaNs.
    types_i = jnp.pad(variant_types_b.astype(jnp.int32), (0, pad))
    depths_i = jnp.pad(depths_b.astype(jnp.int32), (0, pad), constant_values=1)
    alts_i = jnp.pad(alt_counts_b.astype(jnp.int32), (0, pad))

    # Data-independent index math + tiny-table gather hoisted out of the kernel
    # (fuses with the pad/cast/reshape pass in XLA).
    depth_bins = ((depths_i >= DEPTH_CUTOFFS[0]).astype(jnp.int32)
                  + (depths_i >= DEPTH_CUTOFFS[1]).astype(jnp.int32))
    flat_idx = depth_bins * NUM_VARIATION_TYPES + types_i

    alpha_dv = jnp.exp(alpha_pre_exp_dv).astype(jnp.float32)
    beta_dv = jnp.exp(beta_pre_exp_dv).astype(jnp.float32)
    # lgamma(a+b) - lgamma(a) - lgamma(b): only D*V = 15 values, exact gammaln.
    c_dv = (gammaln(alpha_dv + beta_dv) - gammaln(alpha_dv)
            - gammaln(beta_dv)).astype(jnp.float32)

    alpha_b = jnp.take(alpha_dv.reshape(-1), flat_idx).reshape(rows_pad, _COLS)
    beta_b = jnp.take(beta_dv.reshape(-1), flat_idx).reshape(rows_pad, _COLS)
    c_b = jnp.take(c_dv.reshape(-1), flat_idx).reshape(rows_pad, _COLS)
    depths_f = depths_i.astype(jnp.float32).reshape(rows_pad, _COLS)
    alts_f = alts_i.astype(jnp.float32).reshape(rows_pad, _COLS)

    vec_spec = pl.BlockSpec((block_rows, _COLS), lambda i: (i, 0))

    out = pl.pallas_call(
        _artifact_spectra_kernel,
        out_shape=jax.ShapeDtypeStruct((rows_pad, _COLS), jnp.float32),
        grid=(n_blocks,),
        in_specs=[vec_spec] * 5,
        out_specs=vec_spec,
        compiler_params=pltpu.CompilerParams(dimension_semantics=("parallel",)),
    )(depths_f, alts_f, alpha_b, beta_b, c_b)

    return out.reshape(-1)[:B]


# ---- demo / correctness check -----------------------------------------------
if __name__ == "__main__":
    key = jax.random.PRNGKey(0)
    B = 200
    k1, k2, k3 = jax.random.split(key, 3)

    variant_types = jax.random.randint(k1, (B,), 0, NUM_VARIATION_TYPES, dtype=jnp.int32)
    depths = jax.random.randint(k2, (B,), 1, 60, dtype=jnp.int32)
    alt_counts = jnp.minimum(jax.random.randint(k3, (B,), 0, 30, dtype=jnp.int32), depths)

    # deterministic parameter init exactly as in ArtifactSpectra.__init__
    alpha_pre_exp_dv = jnp.log(2.0 * jnp.ones((NUM_DEPTH_BINS, NUM_VARIATION_TYPES), jnp.float32))
    beta_pre_exp_dv = jnp.log(30.0 * jnp.ones((NUM_DEPTH_BINS, NUM_VARIATION_TYPES), jnp.float32))

    out = jax.block_until_ready(
        artifact_spectra_forward(variant_types, depths, alt_counts,
                                 alpha_pre_exp_dv, beta_pre_exp_dv))

    # pure-JAX reference (beta-binomial log-likelihood with gammaln)
    db = ((depths >= DEPTH_CUTOFFS[0]).astype(jnp.int32)
          + (depths >= DEPTH_CUTOFFS[1]).astype(jnp.int32))
    a = jnp.exp(alpha_pre_exp_dv)[db, variant_types]
    b = jnp.exp(beta_pre_exp_dv)[db, variant_types]
    n = depths.astype(jnp.float32)
    kk = alt_counts.astype(jnp.float32)
    ref = (gammaln(kk + a) + gammaln(n - kk + b) + gammaln(a + b)
           - gammaln(n + a + b) - gammaln(a) - gammaln(b)
           + gammaln(n + 1.0) - gammaln(kk + 1.0) - gammaln(n - kk + 1.0))

    err = jnp.max(jnp.abs(out - ref) / (1.0 + jnp.abs(ref)))
    assert err < 1e-2, f"max relative error {err}"
    print("KERNEL_OK")
</pallas_src>

<mosaic_0001>
module attributes {stable_mosaic.version = 11 : i64} {
  func.func @_artifact_spectra_kernel(%arg0: i32, %arg1: memref<8x512xf32, #tpu.memory_space<vmem>>, %arg2: memref<8x512xf32, #tpu.memory_space<vmem>>, %arg3: memref<8x512xf32, #tpu.memory_space<vmem>>, %arg4: memref<8x512xf32, #tpu.memory_space<vmem>>, %arg5: memref<8x512xf32, #tpu.memory_space<vmem>>, %arg6: memref<8x512xf32, #tpu.memory_space<vmem>>) attributes {dimension_semantics = [#tpu.dimension_semantics<parallel>], iteration_bounds = array<i64: 1>, scalar_prefetch = 0 : i64, scratch_operands = 0 : i64, tpu.core_type = #tpu.core_type<tc>, window_params = [{transform_indices = @transform_0, window_bounds = array<i64: 8, 512>}, {transform_indices = @transform_1, window_bounds = array<i64: 8, 512>}, {transform_indices = @transform_2, window_bounds = array<i64: 8, 512>}, {transform_indices = @transform_3, window_bounds = array<i64: 8, 512>}, {transform_indices = @transform_4, window_bounds = array<i64: 8, 512>}, {transform_indices = @transform_5, window_bounds = array<i64: 8, 512>}]} {
    %c0 = arith.constant 0 : index
    %c0_0 = arith.constant 0 : index
    %0 = vector.load %arg1[%c0, %c0_0] : memref<8x512xf32, #tpu.memory_space<vmem>>, vector<8x512xf32>
    %c0_1 = arith.constant 0 : index
    %c0_2 = arith.constant 0 : index
    %1 = vector.load %arg2[%c0_1, %c0_2] : memref<8x512xf32, #tpu.memory_space<vmem>>, vector<8x512xf32>
    %c0_3 = arith.constant 0 : index
    %c0_4 = arith.constant 0 : index
    %2 = vector.load %arg3[%c0_3, %c0_4] : memref<8x512xf32, #tpu.memory_space<vmem>>, vector<8x512xf32>
    %c0_5 = arith.constant 0 : index
    %c0_6 = arith.constant 0 : index
    %3 = vector.load %arg4[%c0_5, %c0_6] : memref<8x512xf32, #tpu.memory_space<vmem>>, vector<8x512xf32>
    %c0_7 = arith.constant 0 : index
    %c0_8 = arith.constant 0 : index
    %4 = vector.load %arg5[%c0_7, %c0_8] : memref<8x512xf32, #tpu.memory_space<vmem>>, vector<8x512xf32>
    %5 = arith.addf %1, %2 : vector<8x512xf32>
    %cst = arith.constant 4.000000e+00 : f32
    %6 = vector.broadcast %cst : f32 to vector<8x512xf32>
    %7 = arith.cmpf olt, %5, %6 : vector<8x512xf32>
    %8 = arith.mulf %5, %5 : vector<8x512xf32>
    %cst_9 = arith.constant 3.000000e+00 : f32
    %9 = vector.broadcast %cst_9 : f32 to vector<8x512xf32>
    %10 = arith.mulf %9, %5 : vector<8x512xf32>
    %11 = arith.addf %8, %10 : vector<8x512xf32>
    %cst_10 = arith.constant 2.000000e+00 : f32
    %12 = vector.broadcast %cst_10 : f32 to vector<8x512xf32>
    %13 = arith.addf %11, %12 : vector<8x512xf32>
    %14 = arith.mulf %11, %13 : vector<8x512xf32>
    %cst_11 = arith.constant 4.000000e+00 : f32
    %15 = vector.broadcast %cst_11 : f32 to vector<8x512xf32>
    %16 = arith.addf %5, %15 : vector<8x512xf32>
    %17 = arith.select %7, %16, %5 : vector<8x512xi1>, vector<8x512xf32>
    %cst_12 = arith.constant 1.000000e+00 : f32
    %18 = vector.broadcast %cst_12 : f32 to vector<8x512xf32>
    %19 = arith.select %7, %14, %18 : vector<8x512xi1>, vector<8x512xf32>
    %20 = tpu.reciprocal %17 {approx = true} : vector<8x512xf32> -> vector<8x512xf32>
    %21 = arith.mulf %20, %20 : vector<8x512xf32>
    %cst_13 = arith.constant 7.93650805E-4 : f32
    %22 = vector.broadcast %cst_13 : f32 to vector<8x512xf32>
    %23 = arith.mulf %21, %22 : vector<8x512xf32>
    %cst_14 = arith.constant 0.00277777785 : f32
    %24 = vector.broadcast %cst_14 : f32 to vector<8x512xf32>
    %25 = arith.subf %24, %23 : vector<8x512xf32>
    %26 = arith.mulf %21, %25 : vector<8x512xf32>
    %cst_15 = arith.constant 0.0833333358 : f32
    %27 = vector.broadcast %cst_15 : f32 to vector<8x512xf32>
    %28 = arith.subf %27, %26 : vector<8x512xf32>
    %29 = arith.mulf %20, %28 : vector<8x512xf32>
    %cst_16 = arith.constant 5.000000e-01 : f32
    %30 = vector.broadcast %cst_16 : f32 to vector<8x512xf32>
    %31 = arith.subf %17, %30 : vector<8x512xf32>
    %32 = math.log %17 : vector<8x512xf32>
    %33 = arith.mulf %31, %32 : vector<8x512xf32>
    %34 = arith.subf %33, %17 : vector<8x512xf32>
    %cst_17 = arith.constant 0.918938517 : f32
    %35 = vector.broadcast %cst_17 : f32 to vector<8x512xf32>
    %36 = arith.addf %34, %35 : vector<8x512xf32>
    %37 = arith.addf %36, %29 : vector<8x512xf32>
    %38 = math.log %19 : vector<8x512xf32>
    %39 = arith.subf %37, %38 : vector<8x512xf32>
    %40 = arith.subf %0, %1 : vector<8x512xf32>
    %41 = arith.addf %40, %3 : vector<8x512xf32>
    %cst_18 = arith.constant 4.000000e+00 : f32
    %42 = vector.broadcast %cst_18 : f32 to vector<8x512xf32>
    %43 = arith.cmpf olt, %41, %42 : vector<8x512xf32>
    %44 = arith.mulf %41, %41 : vector<8x512xf32>
    %cst_19 = arith.constant 3.000000e+00 : f32
    %45 = vector.broadcast %cst_19 : f32 to vector<8x512xf32>
    %46 = arith.mulf %45, %41 : vector<8x512xf32>
    %47 = arith.addf %44, %46 : vector<8x512xf32>
    %cst_20 = arith.constant 2.000000e+00 : f32
    %48 = vector.broadcast %cst_20 : f32 to vector<8x512xf32>
    %49 = arith.addf %47, %48 : vector<8x512xf32>
    %50 = arith.mulf %47, %49 : vector<8x512xf32>
    %cst_21 = arith.constant 4.000000e+00 : f32
    %51 = vector.broadcast %cst_21 : f32 to vector<8x512xf32>
    %52 = arith.addf %41, %51 : vector<8x512xf32>
    %53 = arith.select %43, %52, %41 : vector<8x512xi1>, vector<8x512xf32>
    %cst_22 = arith.constant 1.000000e+00 : f32
    %54 = vector.broadcast %cst_22 : f32 to vector<8x512xf32>
    %55 = arith.select %43, %50, %54 : vector<8x512xi1>, vector<8x512xf32>
    %56 = tpu.reciprocal %53 {approx = true} : vector<8x512xf32> -> vector<8x512xf32>
    %57 = arith.mulf %56, %56 : vector<8x512xf32>
    %cst_23 = arith.constant 7.93650805E-4 : f32
    %58 = vector.broadcast %cst_23 : f32 to vector<8x512xf32>
    %59 = arith.mulf %57, %58 : vector<8x512xf32>
    %cst_24 = arith.constant 0.00277777785 : f32
    %60 = vector.broadcast %cst_24 : f32 to vector<8x512xf32>
    %61 = arith.subf %60, %59 : vector<8x512xf32>
    %62 = arith.mulf %57, %61 : vector<8x512xf32>
    %cst_25 = arith.constant 0.0833333358 : f32
    %63 = vector.broadcast %cst_25 : f32 to vector<8x512xf32>
    %64 = arith.subf %63, %62 : vector<8x512xf32>
    %65 = arith.mulf %56, %64 : vector<8x512xf32>
    %cst_26 = arith.constant 5.000000e-01 : f32
    %66 = vector.broadcast %cst_26 : f32 to vector<8x512xf32>
    %67 = arith.subf %53, %66 : vector<8x512xf32>
    %68 = math.log %53 : vector<8x512xf32>
    %69 = arith.mulf %67, %68 : vector<8x512xf32>
    %70 = arith.subf %69, %53 : vector<8x512xf32>
    %cst_27 = arith.constant 0.918938517 : f32
    %71 = vector.broadcast %cst_27 : f32 to vector<8x512xf32>
    %72 = arith.addf %70, %71 : vector<8x512xf32>
    %73 = arith.addf %72, %65 : vector<8x512xf32>
    %74 = math.log %55 : vector<8x512xf32>
    %75 = arith.subf %73, %74 : vector<8x512xf32>
    %76 = arith.addf %39, %75 : vector<8x512xf32>
    %77 = arith.addf %0, %2 : vector<8x512xf32>
    %78 = arith.addf %77, %3 : vector<8x512xf32>
    %cst_28 = arith.constant 4.000000e+00 : f32
    %79 = vector.broadcast %cst_28 : f32 to vector<8x512xf32>
    %80 = arith.cmpf olt, %78, %79 : vector<8x512xf32>
    %81 = arith.mulf %78, %78 : vector<8x512xf32>
    %cst_29 = arith.constant 3.000000e+00 : f32
    %82 = vector.broadcast %cst_29 : f32 to vector<8x512xf32>
    %83 = arith.mulf %82, %78 : vector<8x512xf32>
    %84 = arith.addf %81, %83 : vector<8x512xf32>
    %cst_30 = arith.constant 2.000000e+00 : f32
    %85 = vector.broadcast %cst_30 : f32 to vector<8x512xf32>
    %86 = arith.addf %84, %85 : vector<8x512xf32>
    %87 = arith.mulf %84, %86 : vector<8x512xf32>
    %cst_31 = arith.constant 4.000000e+00 : f32
    %88 = vector.broadcast %cst_31 : f32 to vector<8x512xf32>
    %89 = arith.addf %78, %88 : vector<8x512xf32>
    %90 = arith.select %80, %89, %78 : vector<8x512xi1>, vector<8x512xf32>
    %cst_32 = arith.constant 1.000000e+00 : f32
    %91 = vector.broadcast %cst_32 : f32 to vector<8x512xf32>
    %92 = arith.select %80, %87, %91 : vector<8x512xi1>, vector<8x512xf32>
    %93 = tpu.reciprocal %90 {approx = true} : vector<8x512xf32> -> vector<8x512xf32>
    %94 = arith.mulf %93, %93 : vector<8x512xf32>
    %cst_33 = arith.constant 7.93650805E-4 : f32
    %95 = vector.broadcast %cst_33 : f32 to vector<8x512xf32>
    %96 = arith.mulf %94, %95 : vector<8x512xf32>
    %cst_34 = arith.constant 0.00277777785 : f32
    %97 = vector.broadcast %cst_34 : f32 to vector<8x512xf32>
    %98 = arith.subf %97, %96 : vector<8x512xf32>
    %99 = arith.mulf %94, %98 : vector<8x512xf32>
    %cst_35 = arith.constant 0.0833333358 : f32
    %100 = vector.broadcast %cst_35 : f32 to vector<8x512xf32>
    %101 = arith.subf %100, %99 : vector<8x512xf32>
    %102 = arith.mulf %93, %101 : vector<8x512xf32>
    %cst_36 = arith.constant 5.000000e-01 : f32
    %103 = vector.broadcast %cst_36 : f32 to vector<8x512xf32>
    %104 = arith.subf %90, %103 : vector<8x512xf32>
    %105 = math.log %90 : vector<8x512xf32>
    %106 = arith.mulf %104, %105 : vector<8x512xf32>
    %107 = arith.subf %106, %90 : vector<8x512xf32>
    %cst_37 = arith.constant 0.918938517 : f32
    %108 = vector.broadcast %cst_37 : f32 to vector<8x512xf32>
    %109 = arith.addf %107, %108 : vector<8x512xf32>
    %110 = arith.addf %109, %102 : vector<8x512xf32>
    %111 = math.log %92 : vector<8x512xf32>
    %112 = arith.subf %110, %111 : vector<8x512xf32>
    %113 = arith.subf %76, %112 : vector<8x512xf32>
    %114 = arith.addf %113, %4 : vector<8x512xf32>
    %cst_38 = arith.constant 1.000000e+00 : f32
    %115 = vector.broadcast %cst_38 : f32 to vector<8x512xf32>
    %116 = arith.addf %0, %115 : vector<8x512xf32>
    %cst_39 = arith.constant 4.000000e+00 : f32
    %117 = vector.broadcast %cst_39 : f32 to vector<8x512xf32>
    %118 = arith.cmpf olt, %116, %117 : vector<8x512xf32>
    %119 = arith.mulf %116, %116 : vector<8x512xf32>
    %cst_40 = arith.constant 3.000000e+00 : f32
    %120 = vector.broadcast %cst_40 : f32 to vector<8x512xf32>
    %121 = arith.mulf %120, %116 : vector<8x512xf32>
    %122 = arith.addf %119, %121 : vector<8x512xf32>
    %cst_41 = arith.constant 2.000000e+00 : f32
    %123 = vector.broadcast %cst_41 : f32 to vector<8x512xf32>
    %124 = arith.addf %122, %123 : vector<8x512xf32>
    %125 = arith.mulf %122, %124 : vector<8x512xf32>
    %cst_42 = arith.constant 4.000000e+00 : f32
    %126 = vector.broadcast %cst_42 : f32 to vector<8x512xf32>
    %127 = arith.addf %116, %126 : vector<8x512xf32>
    %128 = arith.select %118, %127, %116 : vector<8x512xi1>, vector<8x512xf32>
    %cst_43 = arith.constant 1.000000e+00 : f32
    %129 = vector.broadcast %cst_43 : f32 to vector<8x512xf32>
    %130 = arith.select %118, %125, %129 : vector<8x512xi1>, vector<8x512xf32>
    %131 = tpu.reciprocal %128 {approx = true} : vector<8x512xf32> -> vector<8x512xf32>
    %132 = arith.mulf %131, %131 : vector<8x512xf32>
    %cst_44 = arith.constant 7.93650805E-4 : f32
    %133 = vector.broadcast %cst_44 : f32 to vector<8x512xf32>
    %134 = arith.mulf %132, %133 : vector<8x512xf32>
    %cst_45 = arith.constant 0.00277777785 : f32
    %135 = vector.broadcast %cst_45 : f32 to vector<8x512xf32>
    %136 = arith.subf %135, %134 : vector<8x512xf32>
    %137 = arith.mulf %132, %136 : vector<8x512xf32>
    %cst_46 = arith.constant 0.0833333358 : f32
    %138 = vector.broadcast %cst_46 : f32 to vector<8x512xf32>
    %139 = arith.subf %138, %137 : vector<8x512xf32>
    %140 = arith.mulf %131, %139 : vector<8x512xf32>
    %cst_47 = arith.constant 5.000000e-01 : f32
    %141 = vector.broadcast %cst_47 : f32 to vector<8x512xf32>
    %142 = arith.subf %128, %141 : vector<8x512xf32>
    %143 = math.log %128 : vector<8x512xf32>
    %144 = arith.mulf %142, %143 : vector<8x512xf32>
    %145 = arith.subf %144, %128 : vector<8x512xf32>
    %cst_48 = arith.constant 0.918938517 : f32
    %146 = vector.broadcast %cst_48 : f32 to vector<8x512xf32>
    %147 = arith.addf %145, %146 : vector<8x512xf32>
    %148 = arith.addf %147, %140 : vector<8x512xf32>
    %149 = math.log %130 : vector<8x512xf32>
    %150 = arith.subf %148, %149 : vector<8x512xf32>
    %151 = arith.addf %114, %150 : vector<8x512xf32>
    %cst_49 = arith.constant 1.000000e+00 : f32
    %152 = vector.broadcast %cst_49 : f32 to vector<8x512xf32>
    %153 = arith.addf %1, %152 : vector<8x512xf32>
    %cst_50 = arith.constant 4.000000e+00 : f32
    %154 = vector.broadcast %cst_50 : f32 to vector<8x512xf32>
    %155 = arith.cmpf olt, %153, %154 : vector<8x512xf32>
    %156 = arith.mulf %153, %153 : vector<8x512xf32>
    %cst_51 = arith.constant 3.000000e+00 : f32
    %157 = vector.broadcast %cst_51 : f32 to vector<8x512xf32>
    %158 = arith.mulf %157, %153 : vector<8x512xf32>
    %159 = arith.addf %156, %158 : vector<8x512xf32>
    %cst_52 = arith.constant 2.000000e+00 : f32
    %160 = vector.broadcast %cst_52 : f32 to vector<8x512xf32>
    %161 = arith.addf %159, %160 : vector<8x512xf32>
    %162 = arith.mulf %159, %161 : vector<8x512xf32>
    %cst_53 = arith.constant 4.000000e+00 : f32
    %163 = vector.broadcast %cst_53 : f32 to vector<8x512xf32>
    %164 = arith.addf %153, %163 : vector<8x512xf32>
    %165 = arith.select %155, %164, %153 : vector<8x512xi1>, vector<8x512xf32>
    %cst_54 = arith.constant 1.000000e+00 : f32
    %166 = vector.broadcast %cst_54 : f32 to vector<8x512xf32>
    %167 = arith.select %155, %162, %166 : vector<8x512xi1>, vector<8x512xf32>
    %168 = tpu.reciprocal %165 {approx = true} : vector<8x512xf32> -> vector<8x512xf32>
    %169 = arith.mulf %168, %168 : vector<8x512xf32>
    %cst_55 = arith.constant 7.93650805E-4 : f32
    %170 = vector.broadcast %cst_55 : f32 to vector<8x512xf32>
    %171 = arith.mulf %169, %170 : vector<8x512xf32>
    %cst_56 = arith.constant 0.00277777785 : f32
    %172 = vector.broadcast %cst_56 : f32 to vector<8x512xf32>
    %173 = arith.subf %172, %171 : vector<8x512xf32>
    %174 = arith.mulf %169, %173 : vector<8x512xf32>
    %cst_57 = arith.constant 0.0833333358 : f32
    %175 = vector.broadcast %cst_57 : f32 to vector<8x512xf32>
    %176 = arith.subf %175, %174 : vector<8x512xf32>
    %177 = arith.mulf %168, %176 : vector<8x512xf32>
    %cst_58 = arith.constant 5.000000e-01 : f32
    %178 = vector.broadcast %cst_58 : f32 to vector<8x512xf32>
    %179 = arith.subf %165, %178 : vector<8x512xf32>
    %180 = math.log %165 : vector<8x512xf32>
    %181 = arith.mulf %179, %180 : vector<8x512xf32>
    %182 = arith.subf %181, %165 : vector<8x512xf32>
    %cst_59 = arith.constant 0.918938517 : f32
    %183 = vector.broadcast %cst_59 : f32 to vector<8x512xf32>
    %184 = arith.addf %182, %183 : vector<8x512xf32>
    %185 = arith.addf %184, %177 : vector<8x512xf32>
    %186 = math.log %167 : vector<8x512xf32>
    %187 = arith.subf %185, %186 : vector<8x512xf32>
    %188 = arith.subf %151, %187 : vector<8x512xf32>
    %189 = arith.subf %0, %1 : vector<8x512xf32>
    %cst_60 = arith.constant 1.000000e+00 : f32
    %190 = vector.broadcast %cst_60 : f32 to vector<8x512xf32>
    %191 = arith.addf %189, %190 : vector<8x512xf32>
    %cst_61 = arith.constant 4.000000e+00 : f32
    %192 = vector.broadcast %cst_61 : f32 to vector<8x512xf32>
    %193 = arith.cmpf olt, %191, %192 : vector<8x512xf32>
    %194 = arith.mulf %191, %191 : vector<8x512xf32>
    %cst_62 = arith.constant 3.000000e+00 : f32
    %195 = vector.broadcast %cst_62 : f32 to vector<8x512xf32>
    %196 = arith.mulf %195, %191 : vector<8x512xf32>
    %197 = arith.addf %194, %196 : vector<8x512xf32>
    %cst_63 = arith.constant 2.000000e+00 : f32
    %198 = vector.broadcast %cst_63 : f32 to vector<8x512xf32>
    %199 = arith.addf %197, %198 : vector<8x512xf32>
    %200 = arith.mulf %197, %199 : vector<8x512xf32>
    %cst_64 = arith.constant 4.000000e+00 : f32
    %201 = vector.broadcast %cst_64 : f32 to vector<8x512xf32>
    %202 = arith.addf %191, %201 : vector<8x512xf32>
    %203 = arith.select %193, %202, %191 : vector<8x512xi1>, vector<8x512xf32>
    %cst_65 = arith.constant 1.000000e+00 : f32
    %204 = vector.broadcast %cst_65 : f32 to vector<8x512xf32>
    %205 = arith.select %193, %200, %204 : vector<8x512xi1>, vector<8x512xf32>
    %206 = tpu.reciprocal %203 {approx = true} : vector<8x512xf32> -> vector<8x512xf32>
    %207 = arith.mulf %206, %206 : vector<8x512xf32>
    %cst_66 = arith.constant 7.93650805E-4 : f32
    %208 = vector.broadcast %cst_66 : f32 to vector<8x512xf32>
    %209 = arith.mulf %207, %208 : vector<8x512xf32>
    %cst_67 = arith.constant 0.00277777785 : f32
    %210 = vector.broadcast %cst_67 : f32 to vector<8x512xf32>
    %211 = arith.subf %210, %209 : vector<8x512xf32>
    %212 = arith.mulf %207, %211 : vector<8x512xf32>
    %cst_68 = arith.constant 0.0833333358 : f32
    %213 = vector.broadcast %cst_68 : f32 to vector<8x512xf32>
    %214 = arith.subf %213, %212 : vector<8x512xf32>
    %215 = arith.mulf %206, %214 : vector<8x512xf32>
    %cst_69 = arith.constant 5.000000e-01 : f32
    %216 = vector.broadcast %cst_69 : f32 to vector<8x512xf32>
    %217 = arith.subf %203, %216 : vector<8x512xf32>
    %218 = math.log %203 : vector<8x512xf32>
    %219 = arith.mulf %217, %218 : vector<8x512xf32>
    %220 = arith.subf %219, %203 : vector<8x512xf32>
    %cst_70 = arith.constant 0.918938517 : f32
    %221 = vector.broadcast %cst_70 : f32 to vector<8x512xf32>
    %222 = arith.addf %220, %221 : vector<8x512xf32>
    %223 = arith.addf %222, %215 : vector<8x512xf32>
    %224 = math.log %205 : vector<8x512xf32>
    %225 = arith.subf %223, %224 : vector<8x512xf32>
    %226 = arith.subf %188, %225 : vector<8x512xf32>
    %c0_71 = arith.constant 0 : index
    %c0_72 = arith.constant 0 : index
    %227 = vector.load %arg6[%c0_71, %c0_72] : memref<8x512xf32, #tpu.memory_space<vmem>>, vector<8x512xf32>
    tpu.vector_store %arg6[%c0_71, %c0_72], %226 {strides = array<i32>} : memref<8x512xf32, #tpu.memory_space<vmem>>, vector<8x512xf32>,
    return
  }
  func.func @transform_0(%arg0: i32) -> (i32, i32) {
    %c0_i32 = arith.constant 0 : i32
    %c0_i32_0 = arith.constant 0 : i32
    return %arg0, %c0_i32 : i32, i32
  }
  func.func @transform_1(%arg0: i32) -> (i32, i32) {
    %c0_i32 = arith.constant 0 : i32
    %c0_i32_0 = arith.constant 0 : i32
    return %arg0, %c0_i32 : i32, i32
  }
  func.func @transform_2(%arg0: i32) -> (i32, i32) {
    %c0_i32 = arith.constant 0 : i32
    %c0_i32_0 = arith.constant 0 : i32
    return %arg0, %c0_i32 : i32, i32
  }
  func.func @transform_3(%arg0: i32) -> (i32, i32) {
    %c0_i32 = arith.constant 0 : i32
    %c0_i32_0 = arith.constant 0 : i32
    return %arg0, %c0_i32 : i32, i32
  }
  func.func @transform_4(%arg0: i32) -> (i32, i32) {
    %c0_i32 = arith.constant 0 : i32
    %c0_i32_0 = arith.constant 0 : i32
    return %arg0, %c0_i32 : i32, i32
  }
  func.func @transform_5(%arg0: i32) -> (i32, i32) {
    %c0_i32 = arith.constant 0 : i32
    %c0_i32_0 = arith.constant 0 : i32
    return %arg0, %c0_i32 : i32, i32
  }
}

</mosaic_0001>

<llo_original>
// kernel: artifact_spectra_forward.1
$region0: #{artifact_spectra_forward.1}
  #allocation0 [shape = 'u32[]', space=smem, size = 0x4, offset = 0x4, fixed_abs, tag = 'smem constant byte address 0x4 - core index']
  #allocation1 [shape = 'u32[144,128]{1,0:T(1,128)}', space=vmem, size = 0x12000, scoped, tag = 'internal scratch']
  %s0 = inlined_call_operand.vmem [shape: f32[8,512], index: 0, kind: input, shape index: {}]
  %s1 = inlined_call_operand.vmem [shape: f32[8,512], index: 1, kind: input, shape index: {}]
  %s2 = inlined_call_operand.vmem [shape: f32[8,512], index: 2, kind: input, shape index: {}]
  %s3 = inlined_call_operand.vmem [shape: f32[8,512], index: 3, kind: input, shape index: {}]
  %s4 = inlined_call_operand.vmem [shape: f32[8,512], index: 4, kind: input, shape index: {}]
  %s5 = inlined_call_operand.vmem [shape: f32[8,512], index: 5, kind: output, shape index: {}]
  %s6 = sld [smem:[#allocation0]]
  $region30: #{artifact_spectra_forward.1} parent=0
    _
  %s8 = ssub.s32 1, %s6
  %s9 = scalar_select 0, %s8, %s6
  // Predicated region
  $region2: #{artifact_spectra_forward.1} parent=0 // pred_check
    _
  $region3: #{artifact_spectra_forward.1} parent=0 // pred_check_branch
    %11 = sbr.rel (0) target = $region5
  $region4: #{artifact_spectra_forward.1} parent=0 // pred_region
    _
  $region5: #{artifact_spectra_forward.1} parent=0 // pred_fallthru
    _
  // Predicated region
  $region6: #{artifact_spectra_forward.1} parent=0 // pred_check
    _
  $region7: #{artifact_spectra_forward.1} parent=0 // pred_check_branch
    %13 = sbr.rel (0) target = $region9
  $region8: #{artifact_spectra_forward.1} parent=0 // pred_region
    _
  $region9: #{artifact_spectra_forward.1} parent=0 // pred_fallthru
    _
  // Predicated region
  $region10: #{artifact_spectra_forward.1} parent=0 // pred_check
    _
  $region11: #{artifact_spectra_forward.1} parent=0 // pred_check_branch
    %15 = sbr.rel (0) target = $region13
  $region12: #{artifact_spectra_forward.1} parent=0 // pred_region
    _
  $region13: #{artifact_spectra_forward.1} parent=0 // pred_fallthru
    _
  // Predicated region
  $region14: #{artifact_spectra_forward.1} parent=0 // pred_check
    _
  $region15: #{artifact_spectra_forward.1} parent=0 // pred_check_branch
    %17 = sbr.rel (0) target = $region17
  $region16: #{artifact_spectra_forward.1} parent=0 // pred_region
    _
  $region17: #{artifact_spectra_forward.1} parent=0 // pred_fallthru
    _
  // Predicated region
  $region18: #{artifact_spectra_forward.1} parent=0 // pred_check
    _
  $region19: #{artifact_spectra_forward.1} parent=0 // pred_check_branch
    %19 = sbr.rel (0) target = $region21
  $region20: #{artifact_spectra_forward.1} parent=0 // pred_region
    _
  $region21: #{artifact_spectra_forward.1} parent=0 // pred_fallthru
    _
  %v20 = vld [vmem:[%s0] sm:$0xff]
  %v21 = vld [vmem:[%s0 + $0x8] sm:$0xff]
  %v22 = vld [vmem:[%s0 + $0x10] sm:$0xff]
  %v23 = vld [vmem:[%s0 + $0x18] sm:$0xff]
  %v24 = vld [vmem:[%s1] sm:$0xff]
  %v25 = vld [vmem:[%s1 + $0x8] sm:$0xff]
  %v26 = vld [vmem:[%s1 + $0x10] sm:$0xff]
  %v27 = vld [vmem:[%s1 + $0x18] sm:$0xff]
  %v28 = vld [vmem:[%s2] sm:$0xff]
  %v29 = vld [vmem:[%s2 + $0x8] sm:$0xff]
  %v30 = vld [vmem:[%s2 + $0x10] sm:$0xff]
  %v31 = vld [vmem:[%s2 + $0x18] sm:$0xff]
  %v32 = vld [vmem:[%s3] sm:$0xff]
  %v33 = vld [vmem:[%s3 + $0x8] sm:$0xff]
  %v34 = vld [vmem:[%s3 + $0x10] sm:$0xff]
  %v35 = vld [vmem:[%s3 + $0x18] sm:$0xff]
  %v36 = vld [vmem:[%s4] sm:$0xff]
  %v37 = vld [vmem:[%s4 + $0x8] sm:$0xff]
  %v38 = vld [vmem:[%s4 + $0x10] sm:$0xff]
  %v39 = vld [vmem:[%s4 + $0x18] sm:$0xff]
  %v40 = vadd.f32 %v24, %v28
  %v41 = vadd.f32 %v25, %v29
  %v42 = vadd.f32 %v26, %v30
  %v43 = vadd.f32 %v27, %v31
  %vm44 = vcmp.lt.f32.partialorder %v40, 4.0
  %vm45 = vcmp.lt.f32.partialorder %v41, 4.0
  %vm46 = vcmp.lt.f32.partialorder %v42, 4.0
  %vm47 = vcmp.lt.f32.partialorder %v43, 4.0
  %v48 = vmul.f32 %v40, %v40
  %v49 = vmul.f32 %v41, %v41
  %v50 = vmul.f32 %v42, %v42
  %v51 = vmul.f32 %v43, %v43
  %v52 = vmul.f32 %v40, 3.0
  %v53 = vmul.f32 %v41, 3.0
  %v54 = vmul.f32 %v42, 3.0
  %v55 = vmul.f32 %v43, 3.0
  %v56 = vadd.f32 %v48, %v52
  %v57 = vadd.f32 %v49, %v53
  %v58 = vadd.f32 %v50, %v54
  %v59 = vadd.f32 %v51, %v55
  %v60 = vadd.f32 %v56, 2.0
  %v61 = vadd.f32 %v57, 2.0
  %v62 = vadd.f32 %v58, 2.0
  %v63 = vadd.f32 %v59, 2.0
  %v64 = vmul.f32 %v56, %v60
  %v65 = vmul.f32 %v57, %v61
  %v66 = vmul.f32 %v58, %v62
  %v67 = vmul.f32 %v59, %v63
  %v68 = vadd.f32 %v40, 4.0
  %v69 = vadd.f32 %v41, 4.0
  %v70 = vadd.f32 %v42, 4.0
  %v71 = vadd.f32 %v43, 4.0
  %v72 = vsel %vm44, %v68, %v40
  %v73 = vsel %vm45, %v69, %v41
  %v74 = vsel %vm46, %v70, %v42
  %v75 = vsel %vm47, %v71, %v43
  %v76 = vsel %vm44, %v64, 1.0
  %v77 = vsel %vm45, %v65, 1.0
  %v78 = vsel %vm46, %v66, 1.0
  %v79 = vsel %vm47, %v67, 1.0
  %v80 = vrcp.pop %v72
  %v81 = vrcp.pop %v73
  %v82 = vrcp.pop %v74
  %v83 = vrcp.pop %v75
  %v84 = vmul.f32 %v80, %v80
  %v85 = vmul.f32 %v81, %v81
  %v86 = vmul.f32 %v82, %v82
  %v87 = vmul.f32 %v83, %v83
  %v88 = vmul.f32 %v84, 0.0007936508
  %v89 = vmul.f32 %v85, 0.0007936508
  %v90 = vmul.f32 %v86, 0.0007936508
  %v91 = vmul.f32 %v87, 0.0007936508
  %v92 = vsub.f32 0.0027777778, %v88
  %v93 = vsub.f32 0.0027777778, %v89
  %v94 = vsub.f32 0.0027777778, %v90
  %v95 = vsub.f32 0.0027777778, %v91
  %v96 = vmul.f32 %v84, %v92
  %v97 = vmul.f32 %v85, %v93
  %v98 = vmul.f32 %v86, %v94
  %v99 = vmul.f32 %v87, %v95
  %v100 = vsub.f32 0.083333336, %v96
  %v101 = vsub.f32 0.083333336, %v97
  %v102 = vsub.f32 0.083333336, %v98
  %v103 = vsub.f32 0.083333336, %v99
  %v104 = vmul.f32 %v80, %v100
  %v105 = vmul.f32 %v81, %v101
  %v106 = vmul.f32 %v82, %v102
  %v107 = vmul.f32 %v83, %v103
  %v108 = vsub.f32 %v72, 0.5
  %v109 = vsub.f32 %v73, 0.5
  %v110 = vsub.f32 %v74, 0.5
  %v111 = vsub.f32 %v75, 0.5
  %v112 = vlog2.pop %v72
  %v113 = vmul.f32 %v112, 0.6931472
  %v114 = vlog2.pop %v73
  %v115 = vmul.f32 %v114, 0.6931472
  %v116 = vlog2.pop %v74
  %v117 = vmul.f32 %v116, 0.6931472
  %v118 = vlog2.pop %v75
  %v119 = vmul.f32 %v118, 0.6931472
  %v120 = vmul.f32 %v108, %v113
  %v121 = vmul.f32 %v109, %v115
  %v122 = vmul.f32 %v110, %v117
  %v123 = vmul.f32 %v111, %v119
  %v124 = vsub.f32 %v120, %v72
  %v125 = vsub.f32 %v121, %v73
  %v126 = vsub.f32 %v122, %v74
  %v127 = vsub.f32 %v123, %v75
  %v128 = vadd.f32 %v124, 0.9189385
  %v129 = vadd.f32 %v125, 0.9189385
  %v130 = vadd.f32 %v126, 0.9189385
  %v131 = vadd.f32 %v127, 0.9189385
  %v132 = vadd.f32 %v128, %v104
  %v133 = vadd.f32 %v129, %v105
  %v134 = vadd.f32 %v130, %v106
  %v135 = vadd.f32 %v131, %v107
  %v136 = vlog2.pop %v76
  %v137 = vmul.f32 %v136, 0.6931472
  %v138 = vlog2.pop %v77
  %v139 = vmul.f32 %v138, 0.6931472
  %v140 = vlog2.pop %v78
  %v141 = vmul.f32 %v140, 0.6931472
  %v142 = vlog2.pop %v79
  %v143 = vmul.f32 %v142, 0.6931472
  %v144 = vsub.f32 %v132, %v137
  %v145 = vsub.f32 %v133, %v139
  %v146 = vsub.f32 %v134, %v141
  %v147 = vsub.f32 %v135, %v143
  %v148 = vsub.f32 %v20, %v24
  %v149 = vsub.f32 %v21, %v25
  %v150 = vsub.f32 %v22, %v26
  %v151 = vsub.f32 %v23, %v27
  %v152 = vadd.f32 %v148, %v32
  %v153 = vadd.f32 %v149, %v33
  %v154 = vadd.f32 %v150, %v34
  %v155 = vadd.f32 %v151, %v35
  %vm156 = vcmp.lt.f32.partialorder %v152, 4.0
  %vm157 = vcmp.lt.f32.partialorder %v153, 4.0
  %vm158 = vcmp.lt.f32.partialorder %v154, 4.0
  %vm159 = vcmp.lt.f32.partialorder %v155, 4.0
  %v160 = vmul.f32 %v152, %v152
  %v161 = vmul.f32 %v153, %v153
  %v162 = vmul.f32 %v154, %v154
  %v163 = vmul.f32 %v155, %v155
  %v164 = vmul.f32 %v152, 3.0
  %v165 = vmul.f32 %v153, 3.0
  %v166 = vmul.f32 %v154, 3.0
  %v167 = vmul.f32 %v155, 3.0
  %v168 = vadd.f32 %v160, %v164
  %v169 = vadd.f32 %v161, %v165
  %v170 = vadd.f32 %v162, %v166
  %v171 = vadd.f32 %v163, %v167
  %v172 = vadd.f32 %v168, 2.0
  %v173 = vadd.f32 %v169, 2.0
  %v174 = vadd.f32 %v170, 2.0
  %v175 = vadd.f32 %v171, 2.0
  %v176 = vmul.f32 %v168, %v172
  %v177 = vmul.f32 %v169, %v173
  %v178 = vmul.f32 %v170, %v174
  %v179 = vmul.f32 %v171, %v175
  %v180 = vadd.f32 %v152, 4.0
  %v181 = vadd.f32 %v153, 4.0
  %v182 = vadd.f32 %v154, 4.0
  %v183 = vadd.f32 %v155, 4.0
  %v184 = vsel %vm156, %v180, %v152
  %v185 = vsel %vm157, %v181, %v153
  %v186 = vsel %vm158, %v182, %v154
  %v187 = vsel %vm159, %v183, %v155
  %v188 = vsel %vm156, %v176, 1.0
  %v189 = vsel %vm157, %v177, 1.0
  %v190 = vsel %vm158, %v178, 1.0
  %v191 = vsel %vm159, %v179, 1.0
  %v192 = vrcp.pop %v184
  %v193 = vrcp.pop %v185
  %v194 = vrcp.pop %v186
  %v195 = vrcp.pop %v187
  %v196 = vmul.f32 %v192, %v192
  %v197 = vmul.f32 %v193, %v193
  %v198 = vmul.f32 %v194, %v194
  %v199 = vmul.f32 %v195, %v195
  %v200 = vmul.f32 %v196, 0.0007936508
  %v201 = vmul.f32 %v197, 0.0007936508
  %v202 = vmul.f32 %v198, 0.0007936508
  %v203 = vmul.f32 %v199, 0.0007936508
  %v204 = vsub.f32 0.0027777778, %v200
  %v205 = vsub.f32 0.0027777778, %v201
  %v206 = vsub.f32 0.0027777778, %v202
  %v207 = vsub.f32 0.0027777778, %v203
  %v208 = vmul.f32 %v196, %v204
  %v209 = vmul.f32 %v197, %v205
  %v210 = vmul.f32 %v198, %v206
  %v211 = vmul.f32 %v199, %v207
  %v212 = vsub.f32 0.083333336, %v208
  %v213 = vsub.f32 0.083333336, %v209
  %v214 = vsub.f32 0.083333336, %v210
  %v215 = vsub.f32 0.083333336, %v211
  %v216 = vmul.f32 %v192, %v212
  %v217 = vmul.f32 %v193, %v213
  %v218 = vmul.f32 %v194, %v214
  %v219 = vmul.f32 %v195, %v215
  %v220 = vsub.f32 %v184, 0.5
  %v221 = vsub.f32 %v185, 0.5
  %v222 = vsub.f32 %v186, 0.5
  %v223 = vsub.f32 %v187, 0.5
  %v224 = vlog2.pop %v184
  %v225 = vmul.f32 %v224, 0.6931472
  %v226 = vlog2.pop %v185
  %v227 = vmul.f32 %v226, 0.6931472
  %v228 = vlog2.pop %v186
  %v229 = vmul.f32 %v228, 0.6931472
  %v230 = vlog2.pop %v187
  %v231 = vmul.f32 %v230, 0.6931472
  %v232 = vmul.f32 %v220, %v225
  %v233 = vmul.f32 %v221, %v227
  %v234 = vmul.f32 %v222, %v229
  %v235 = vmul.f32 %v223, %v231
  %v236 = vsub.f32 %v232, %v184
  %v237 = vsub.f32 %v233, %v185
  %v238 = vsub.f32 %v234, %v186
  %v239 = vsub.f32 %v235, %v187
  %v240 = vadd.f32 %v236, 0.9189385
  %v241 = vadd.f32 %v237, 0.9189385
  %v242 = vadd.f32 %v238, 0.9189385
  %v243 = vadd.f32 %v239, 0.9189385
  %v244 = vadd.f32 %v240, %v216
  %v245 = vadd.f32 %v241, %v217
  %v246 = vadd.f32 %v242, %v218
  %v247 = vadd.f32 %v243, %v219
  %v248 = vlog2.pop %v188
  %v249 = vmul.f32 %v248, 0.6931472
  %v250 = vlog2.pop %v189
  %v251 = vmul.f32 %v250, 0.6931472
  %v252 = vlog2.pop %v190
  %v253 = vmul.f32 %v252, 0.6931472
  %v254 = vlog2.pop %v191
  %v255 = vmul.f32 %v254, 0.6931472
  %v256 = vsub.f32 %v244, %v249
  %v257 = vsub.f32 %v245, %v251
  %v258 = vsub.f32 %v246, %v253
  %v259 = vsub.f32 %v247, %v255
  %v260 = vadd.f32 %v144, %v256
  %v261 = vadd.f32 %v145, %v257
  %v262 = vadd.f32 %v146, %v258
  %v263 = vadd.f32 %v147, %v259
  %v264 = vadd.f32 %v20, %v28
  %v265 = vadd.f32 %v21, %v29
  %v266 = vadd.f32 %v22, %v30
  %v267 = vadd.f32 %v23, %v31
  %v268 = vadd.f32 %v264, %v32
  %v269 = vadd.f32 %v265, %v33
  %v270 = vadd.f32 %v266, %v34
  %v271 = vadd.f32 %v267, %v35
  %vm272 = vcmp.lt.f32.partialorder %v268, 4.0
  %vm273 = vcmp.lt.f32.partialorder %v269, 4.0
  %vm274 = vcmp.lt.f32.partialorder %v270, 4.0
  %vm275 = vcmp.lt.f32.partialorder %v271, 4.0
  %v276 = vmul.f32 %v268, %v268
  %v277 = vmul.f32 %v269, %v269
  %v278 = vmul.f32 %v270, %v270
  %v279 = vmul.f32 %v271, %v271
  %v280 = vmul.f32 %v268, 3.0
  %v281 = vmul.f32 %v269, 3.0
  %v282 = vmul.f32 %v270, 3.0
  %v283 = vmul.f32 %v271, 3.0
  %v284 = vadd.f32 %v276, %v280
  %v285 = vadd.f32 %v277, %v281
  %v286 = vadd.f32 %v278, %v282
  %v287 = vadd.f32 %v279, %v283
  %v288 = vadd.f32 %v284, 2.0
  %v289 = vadd.f32 %v285, 2.0
  %v290 = vadd.f32 %v286, 2.0
  %v291 = vadd.f32 %v287, 2.0
  %v292 = vmul.f32 %v284, %v288
  %v293 = vmul.f32 %v285, %v289
  %v294 = vmul.f32 %v286, %v290
  %v295 = vmul.f32 %v287, %v291
  %v296 = vadd.f32 %v268, 4.0
  %v297 = vadd.f32 %v269, 4.0
  %v298 = vadd.f32 %v270, 4.0
  %v299 = vadd.f32 %v271, 4.0
  %v300 = vsel %vm272, %v296, %v268
  %v301 = vsel %vm273, %v297, %v269
  %v302 = vsel %vm274, %v298, %v270
  %v303 = vsel %vm275, %v299, %v271
  %v304 = vsel %vm272, %v292, 1.0
  %v305 = vsel %vm273, %v293, 1.0
  %v306 = vsel %vm274, %v294, 1.0
  %v307 = vsel %vm275, %v295, 1.0
  %v308 = vrcp.pop %v300
  %v309 = vrcp.pop %v301
  %v310 = vrcp.pop %v302
  %v311 = vrcp.pop %v303
  %v312 = vmul.f32 %v308, %v308
  %v313 = vmul.f32 %v309, %v309
  %v314 = vmul.f32 %v310, %v310
  %v315 = vmul.f32 %v311, %v311
  %v316 = vmul.f32 %v312, 0.0007936508
  %v317 = vmul.f32 %v313, 0.0007936508
  %v318 = vmul.f32 %v314, 0.0007936508
  %v319 = vmul.f32 %v315, 0.0007936508
  %v320 = vsub.f32 0.0027777778, %v316
  %v321 = vsub.f32 0.0027777778, %v317
  %v322 = vsub.f32 0.0027777778, %v318
  %v323 = vsub.f32 0.0027777778, %v319
  %v324 = vmul.f32 %v312, %v320
  %v325 = vmul.f32 %v313, %v321
  %v326 = vmul.f32 %v314, %v322
  %v327 = vmul.f32 %v315, %v323
  %v328 = vsub.f32 0.083333336, %v324
  %v329 = vsub.f32 0.083333336, %v325
  %v330 = vsub.f32 0.083333336, %v326
  %v331 = vsub.f32 0.083333336, %v327
  %v332 = vmul.f32 %v308, %v328
  %v333 = vmul.f32 %v309, %v329
  %v334 = vmul.f32 %v310, %v330
  %v335 = vmul.f32 %v311, %v331
  %v336 = vsub.f32 %v300, 0.5
  %v337 = vsub.f32 %v301, 0.5
  %v338 = vsub.f32 %v302, 0.5
  %v339 = vsub.f32 %v303, 0.5
  %v340 = vlog2.pop %v300
  %v341 = vmul.f32 %v340, 0.6931472
  %v342 = vlog2.pop %v301
  %v343 = vmul.f32 %v342, 0.6931472
  %v344 = vlog2.pop %v302
  %v345 = vmul.f32 %v344, 0.6931472
  %v346 = vlog2.pop %v303
  %v347 = vmul.f32 %v346, 0.6931472
  %v348 = vmul.f32 %v336, %v341
  %v349 = vmul.f32 %v337, %v343
  %v350 = vmul.f32 %v338, %v345
  %v351 = vmul.f32 %v339, %v347
  %v352 = vsub.f32 %v348, %v300
  %v353 = vsub.f32 %v349, %v301
  %v354 = vsub.f32 %v350, %v302
  %v355 = vsub.f32 %v351, %v303
  %v356 = vadd.f32 %v352, 0.9189385
  %v357 = vadd.f32 %v353, 0.9189385
  %v358 = vadd.f32 %v354, 0.9189385
  %v359 = vadd.f32 %v355, 0.9189385
  %v360 = vadd.f32 %v356, %v332
  %v361 = vadd.f32 %v357, %v333
  %v362 = vadd.f32 %v358, %v334
  %v363 = vadd.f32 %v359, %v335
  %v364 = vlog2.pop %v304
  %v365 = vmul.f32 %v364, 0.6931472
  %v366 = vlog2.pop %v305
  %v367 = vmul.f32 %v366, 0.6931472
  %v368 = vlog2.pop %v306
  %v369 = vmul.f32 %v368, 0.6931472
  %v370 = vlog2.pop %v307
  %v371 = vmul.f32 %v370, 0.6931472
  %v372 = vsub.f32 %v360, %v365
  %v373 = vsub.f32 %v361, %v367
  %v374 = vsub.f32 %v362, %v369
  %v375 = vsub.f32 %v363, %v371
  %v376 = vsub.f32 %v260, %v372
  %v377 = vsub.f32 %v261, %v373
  %v378 = vsub.f32 %v262, %v374
  %v379 = vsub.f32 %v263, %v375
  %v380 = vadd.f32 %v376, %v36
  %v381 = vadd.f32 %v377, %v37
  %v382 = vadd.f32 %v378, %v38
  %v383 = vadd.f32 %v379, %v39
  %v384 = vadd.f32 %v20, 1.0
  %v385 = vadd.f32 %v21, 1.0
  %v386 = vadd.f32 %v22, 1.0
  %v387 = vadd.f32 %v23, 1.0
  %vm388 = vcmp.lt.f32.partialorder %v384, 4.0
  %vm389 = vcmp.lt.f32.partialorder %v385, 4.0
  %vm390 = vcmp.lt.f32.partialorder %v386, 4.0
  %vm391 = vcmp.lt.f32.partialorder %v387, 4.0
  %v392 = vmul.f32 %v384, %v384
  %v393 = vmul.f32 %v385, %v385
  %v394 = vmul.f32 %v386, %v386
  %v395 = vmul.f32 %v387, %v387
  %v396 = vmul.f32 %v384, 3.0
  %v397 = vmul.f32 %v385, 3.0
  %v398 = vmul.f32 %v386, 3.0
  %v399 = vmul.f32 %v387, 3.0
  %v400 = vadd.f32 %v392, %v396
  %v401 = vadd.f32 %v393, %v397
  %v402 = vadd.f32 %v394, %v398
  %v403 = vadd.f32 %v395, %v399
  %v404 = vadd.f32 %v400, 2.0
  %v405 = vadd.f32 %v401, 2.0
  %v406 = vadd.f32 %v402, 2.0
  %v407 = vadd.f32 %v403, 2.0
  %v408 = vmul.f32 %v400, %v404
  %v409 = vmul.f32 %v401, %v405
  %v410 = vmul.f32 %v402, %v406
  %v411 = vmul.f32 %v403, %v407
  %v412 = vadd.f32 %v384, 4.0
  %v413 = vadd.f32 %v385, 4.0
  %v414 = vadd.f32 %v386, 4.0
  %v415 = vadd.f32 %v387, 4.0
  %v416 = vsel %vm388, %v412, %v384
  %v417 = vsel %vm389, %v413, %v385
  %v418 = vsel %vm390, %v414, %v386
  %v419 = vsel %vm391, %v415, %v387
  %v420 = vsel %vm388, %v408, 1.0
  %v421 = vsel %vm389, %v409, 1.0
  %v422 = vsel %vm390, %v410, 1.0
  %v423 = vsel %vm391, %v411, 1.0
  %v424 = vrcp.pop %v416
  %v425 = vrcp.pop %v417
  %v426 = vrcp.pop %v418
  %v427 = vrcp.pop %v419
  %v428 = vmul.f32 %v424, %v424
  %v429 = vmul.f32 %v425, %v425
  %v430 = vmul.f32 %v426, %v426
  %v431 = vmul.f32 %v427, %v427
  %v432 = vmul.f32 %v428, 0.0007936508
  %v433 = vmul.f32 %v429, 0.0007936508
  %v434 = vmul.f32 %v430, 0.0007936508
  %v435 = vmul.f32 %v431, 0.0007936508
  %v436 = vsub.f32 0.0027777778, %v432
  %v437 = vsub.f32 0.0027777778, %v433
  %v438 = vsub.f32 0.0027777778, %v434
  %v439 = vsub.f32 0.0027777778, %v435
  %v440 = vmul.f32 %v428, %v436
  %v441 = vmul.f32 %v429, %v437
  %v442 = vmul.f32 %v430, %v438
  %v443 = vmul.f32 %v431, %v439
  %v444 = vsub.f32 0.083333336, %v440
  %v445 = vsub.f32 0.083333336, %v441
  %v446 = vsub.f32 0.083333336, %v442
  %v447 = vsub.f32 0.083333336, %v443
  %v448 = vmul.f32 %v424, %v444
  %v449 = vmul.f32 %v425, %v445
  %v450 = vmul.f32 %v426, %v446
  %v451 = vmul.f32 %v427, %v447
  %v452 = vsub.f32 %v416, 0.5
  %v453 = vsub.f32 %v417, 0.5
  %v454 = vsub.f32 %v418, 0.5
  %v455 = vsub.f32 %v419, 0.5
  %v456 = vlog2.pop %v416
  %v457 = vmul.f32 %v456, 0.6931472
  %v458 = vlog2.pop %v417
  %v459 = vmul.f32 %v458, 0.6931472
  %v460 = vlog2.pop %v418
  %v461 = vmul.f32 %v460, 0.6931472
  %v462 = vlog2.pop %v419
  %v463 = vmul.f32 %v462, 0.6931472
  %v464 = vmul.f32 %v452, %v457
  %v465 = vmul.f32 %v453, %v459
  %v466 = vmul.f32 %v454, %v461
  %v467 = vmul.f32 %v455, %v463
  %v468 = vsub.f32 %v464, %v416
  %v469 = vsub.f32 %v465, %v417
  %v470 = vsub.f32 %v466, %v418
  %v471 = vsub.f32 %v467, %v419
  %v472 = vadd.f32 %v468, 0.9189385
  %v473 = vadd.f32 %v469, 0.9189385
  %v474 = vadd.f32 %v470, 0.9189385
  %v475 = vadd.f32 %v471, 0.9189385
  %v476 = vadd.f32 %v472, %v448
  %v477 = vadd.f32 %v473, %v449
  %v478 = vadd.f32 %v474, %v450
  %v479 = vadd.f32 %v475, %v451
  %v480 = vlog2.pop %v420
  %v481 = vmul.f32 %v480, 0.6931472
  %v482 = vlog2.pop %v421
  %v483 = vmul.f32 %v482, 0.6931472
  %v484 = vlog2.pop %v422
  %v485 = vmul.f32 %v484, 0.6931472
  %v486 = vlog2.pop %v423
  %v487 = vmul.f32 %v486, 0.6931472
  %v488 = vsub.f32 %v476, %v481
  %v489 = vsub.f32 %v477, %v483
  %v490 = vsub.f32 %v478, %v485
  %v491 = vsub.f32 %v479, %v487
  %v492 = vadd.f32 %v380, %v488
  %v493 = vadd.f32 %v381, %v489
  %v494 = vadd.f32 %v382, %v490
  %v495 = vadd.f32 %v383, %v491
  %v496 = vadd.f32 %v24, 1.0
  %v497 = vadd.f32 %v25, 1.0
  %v498 = vadd.f32 %v26, 1.0
  %v499 = vadd.f32 %v27, 1.0
  %vm500 = vcmp.lt.f32.partialorder %v496, 4.0
  %vm501 = vcmp.lt.f32.partialorder %v497, 4.0
  %vm502 = vcmp.lt.f32.partialorder %v498, 4.0
  %vm503 = vcmp.lt.f32.partialorder %v499, 4.0
  %v504 = vmul.f32 %v496, %v496
  %v505 = vmul.f32 %v497, %v497
  %v506 = vmul.f32 %v498, %v498
  %v507 = vmul.f32 %v499, %v499
  %v508 = vmul.f32 %v496, 3.0
  %v509 = vmul.f32 %v497, 3.0
  %v510 = vmul.f32 %v498, 3.0
  %v511 = vmul.f32 %v499, 3.0
  %v512 = vadd.f32 %v504, %v508
  %v513 = vadd.f32 %v505, %v509
  %v514 = vadd.f32 %v506, %v510
  %v515 = vadd.f32 %v507, %v511
  %v516 = vadd.f32 %v512, 2.0
  %v517 = vadd.f32 %v513, 2.0
  %v518 = vadd.f32 %v514, 2.0
  %v519 = vadd.f32 %v515, 2.0
  %v520 = vmul.f32 %v512, %v516
  %v521 = vmul.f32 %v513, %v517
  %v522 = vmul.f32 %v514, %v518
  %v523 = vmul.f32 %v515, %v519
  %v524 = vadd.f32 %v496, 4.0
  %v525 = vadd.f32 %v497, 4.0
  %v526 = vadd.f32 %v498, 4.0
  %v527 = vadd.f32 %v499, 4.0
  %v528 = vsel %vm500, %v524, %v496
  %v529 = vsel %vm501, %v525, %v497
  %v530 = vsel %vm502, %v526, %v498
  %v531 = vsel %vm503, %v527, %v499
  %v532 = vsel %vm500, %v520, 1.0
  %v533 = vsel %vm501, %v521, 1.0
  %v534 = vsel %vm502, %v522, 1.0
  %v535 = vsel %vm503, %v523, 1.0
  %v536 = vrcp.pop %v528
  %v537 = vrcp.pop %v529
  %v538 = vrcp.pop %v530
  %v539 = vrcp.pop %v531
  %v540 = vmul.f32 %v536, %v536
  %v541 = vmul.f32 %v537, %v537
  %v542 = vmul.f32 %v538, %v538
  %v543 = vmul.f32 %v539, %v539
  %v544 = vmul.f32 %v540, 0.0007936508
  %v545 = vmul.f32 %v541, 0.0007936508
  %v546 = vmul.f32 %v542, 0.0007936508
  %v547 = vmul.f32 %v543, 0.0007936508
  %v548 = vsub.f32 0.0027777778, %v544
  %v549 = vsub.f32 0.0027777778, %v545
  %v550 = vsub.f32 0.0027777778, %v546
  %v551 = vsub.f32 0.0027777778, %v547
  %v552 = vmul.f32 %v540, %v548
  %v553 = vmul.f32 %v541, %v549
  %v554 = vmul.f32 %v542, %v550
  %v555 = vmul.f32 %v543, %v551
  %v556 = vsub.f32 0.083333336, %v552
  %v557 = vsub.f32 0.083333336, %v553
  %v558 = vsub.f32 0.083333336, %v554
  %v559 = vsub.f32 0.083333336, %v555
  %v560 = vmul.f32 %v536, %v556
  %v561 = vmul.f32 %v537, %v557
  %v562 = vmul.f32 %v538, %v558
  %v563 = vmul.f32 %v539, %v559
  %v564 = vsub.f32 %v528, 0.5
  %v565 = vsub.f32 %v529, 0.5
  %v566 = vsub.f32 %v530, 0.5
  %v567 = vsub.f32 %v531, 0.5
  %v568 = vlog2.pop %v528
  %v569 = vmul.f32 %v568, 0.6931472
  %v570 = vlog2.pop %v529
  %v571 = vmul.f32 %v570, 0.6931472
  %v572 = vlog2.pop %v530
  %v573 = vmul.f32 %v572, 0.6931472
  %v574 = vlog2.pop %v531
  %v575 = vmul.f32 %v574, 0.6931472
  %v576 = vmul.f32 %v564, %v569
  %v577 = vmul.f32 %v565, %v571
  %v578 = vmul.f32 %v566, %v573
  %v579 = vmul.f32 %v567, %v575
  %v580 = vsub.f32 %v576, %v528
  %v581 = vsub.f32 %v577, %v529
  %v582 = vsub.f32 %v578, %v530
  %v583 = vsub.f32 %v579, %v531
  %v584 = vadd.f32 %v580, 0.9189385
  %v585 = vadd.f32 %v581, 0.9189385
  %v586 = vadd.f32 %v582, 0.9189385
  %v587 = vadd.f32 %v583, 0.9189385
  %v588 = vadd.f32 %v584, %v560
  %v589 = vadd.f32 %v585, %v561
  %v590 = vadd.f32 %v586, %v562
  %v591 = vadd.f32 %v587, %v563
  %v592 = vlog2.pop %v532
  %v593 = vmul.f32 %v592, 0.6931472
  %v594 = vlog2.pop %v533
  %v595 = vmul.f32 %v594, 0.6931472
  %v596 = vlog2.pop %v534
  %v597 = vmul.f32 %v596, 0.6931472
  %v598 = vlog2.pop %v535
  %v599 = vmul.f32 %v598, 0.6931472
  %v600 = vsub.f32 %v588, %v593
  %v601 = vsub.f32 %v589, %v595
  %v602 = vsub.f32 %v590, %v597
  %v603 = vsub.f32 %v591, %v599
  %v604 = vsub.f32 %v492, %v600
  %v605 = vsub.f32 %v493, %v601
  %v606 = vsub.f32 %v494, %v602
  %v607 = vsub.f32 %v495, %v603
  %v608 = vadd.f32 %v148, 1.0
  %v609 = vadd.f32 %v149, 1.0
  %v610 = vadd.f32 %v150, 1.0
  %v611 = vadd.f32 %v151, 1.0
  %vm612 = vcmp.lt.f32.partialorder %v608, 4.0
  %vm613 = vcmp.lt.f32.partialorder %v609, 4.0
  %vm614 = vcmp.lt.f32.partialorder %v610, 4.0
  %vm615 = vcmp.lt.f32.partialorder %v611, 4.0
  %v616 = vmul.f32 %v608, %v608
  %v617 = vmul.f32 %v609, %v609
  %v618 = vmul.f32 %v610, %v610
  %v619 = vmul.f32 %v611, %v611
  %v620 = vmul.f32 %v608, 3.0
  %v621 = vmul.f32 %v609, 3.0
  %v622 = vmul.f32 %v610, 3.0
  %v623 = vmul.f32 %v611, 3.0
  %v624 = vadd.f32 %v616, %v620
  %v625 = vadd.f32 %v617, %v621
  %v626 = vadd.f32 %v618, %v622
  %v627 = vadd.f32 %v619, %v623
  %v628 = vadd.f32 %v624, 2.0
  %v629 = vadd.f32 %v625, 2.0
  %v630 = vadd.f32 %v626, 2.0
  %v631 = vadd.f32 %v627, 2.0
  %v632 = vmul.f32 %v624, %v628
  %v633 = vmul.f32 %v625, %v629
  %v634 = vmul.f32 %v626, %v630
  %v635 = vmul.f32 %v627, %v631
  %v636 = vadd.f32 %v608, 4.0
  %v637 = vadd.f32 %v609, 4.0
  %v638 = vadd.f32 %v610, 4.0
  %v639 = vadd.f32 %v611, 4.0
  %v640 = vsel %vm612, %v636, %v608
  %v641 = vsel %vm613, %v637, %v609
  %v642 = vsel %vm614, %v638, %v610
  %v643 = vsel %vm615, %v639, %v611
  %v644 = vsel %vm612, %v632, 1.0
  %v645 = vsel %vm613, %v633, 1.0
  %v646 = vsel %vm614, %v634, 1.0
  %v647 = vsel %vm615, %v635, 1.0
  %v648 = vrcp.pop %v640
  %v649 = vrcp.pop %v641
  %v650 = vrcp.pop %v642
  %v651 = vrcp.pop %v643
  %v652 = vmul.f32 %v648, %v648
  %v653 = vmul.f32 %v649, %v649
  %v654 = vmul.f32 %v650, %v650
  %v655 = vmul.f32 %v651, %v651
  %v656 = vmul.f32 %v652, 0.0007936508
  %v657 = vmul.f32 %v653, 0.0007936508
  %v658 = vmul.f32 %v654, 0.0007936508
  %v659 = vmul.f32 %v655, 0.0007936508
  %v660 = vsub.f32 0.0027777778, %v656
  %v661 = vsub.f32 0.0027777778, %v657
  %v662 = vsub.f32 0.0027777778, %v658
  %v663 = vsub.f32 0.0027777778, %v659
  %v664 = vmul.f32 %v652, %v660
  %v665 = vmul.f32 %v653, %v661
  %v666 = vmul.f32 %v654, %v662
  %v667 = vmul.f32 %v655, %v663
  %v668 = vsub.f32 0.083333336, %v664
  %v669 = vsub.f32 0.083333336, %v665
  %v670 = vsub.f32 0.083333336, %v666
  %v671 = vsub.f32 0.083333336, %v667
  %v672 = vmul.f32 %v648, %v668
  %v673 = vmul.f32 %v649, %v669
  %v674 = vmul.f32 %v650, %v670
  %v675 = vmul.f32 %v651, %v671
  %v676 = vsub.f32 %v640, 0.5
  %v677 = vsub.f32 %v641, 0.5
  %v678 = vsub.f32 %v642, 0.5
  %v679 = vsub.f32 %v643, 0.5
  %v680 = vlog2.pop %v640
  %v681 = vmul.f32 %v680, 0.6931472
  %v682 = vlog2.pop %v641
  %v683 = vmul.f32 %v682, 0.6931472
  %v684 = vlog2.pop %v642
  %v685 = vmul.f32 %v684, 0.6931472
  %v686 = vlog2.pop %v643
  %v687 = vmul.f32 %v686, 0.6931472
  %v688 = vmul.f32 %v676, %v681
  %v689 = vmul.f32 %v677, %v683
  %v690 = vmul.f32 %v678, %v685
  %v691 = vmul.f32 %v679, %v687
  %v692 = vsub.f32 %v688, %v640
  %v693 = vsub.f32 %v689, %v641
  %v694 = vsub.f32 %v690, %v642
  %v695 = vsub.f32 %v691, %v643
  %v696 = vadd.f32 %v692, 0.9189385
  %v697 = vadd.f32 %v693, 0.9189385
  %v698 = vadd.f32 %v694, 0.9189385
  %v699 = vadd.f32 %v695, 0.9189385
  %v700 = vadd.f32 %v696, %v672
  %v701 = vadd.f32 %v697, %v673
  %v702 = vadd.f32 %v698, %v674
  %v703 = vadd.f32 %v699, %v675
  %v704 = vlog2.pop %v644
  %v705 = vmul.f32 %v704, 0.6931472
  %v706 = vlog2.pop %v645
  %v707 = vmul.f32 %v706, 0.6931472
  %v708 = vlog2.pop %v646
  %v709 = vmul.f32 %v708, 0.6931472
  %v710 = vlog2.pop %v647
  %v711 = vmul.f32 %v710, 0.6931472
  %v712 = vsub.f32 %v700, %v705
  %v713 = vsub.f32 %v701, %v707
  %v714 = vsub.f32 %v702, %v709
  %v715 = vsub.f32 %v703, %v711
  %v716 = vsub.f32 %v604, %v712
  %v717 = vsub.f32 %v605, %v713
  %v718 = vsub.f32 %v606, %v714
  %v719 = vsub.f32 %v607, %v715
  %720 = vst [vmem:[%s5] sm:$0xff] %v716
  %721 = vst [vmem:[%s5 + $0x8] sm:$0xff] %v717
  %722 = vst [vmem:[%s5 + $0x10] sm:$0xff] %v718
  %723 = vst [vmem:[%s5 + $0x18] sm:$0xff] %v719
  // Predicated region
  $region22: #{artifact_spectra_forward.1} parent=0 // pred_check
    _
  $region23: #{artifact_spectra_forward.1} parent=0 // pred_check_branch
    %725 = sbr.rel (0) target = $region25
  $region24: #{artifact_spectra_forward.1} parent=0 // pred_region
    _
  $region25: #{artifact_spectra_forward.1} parent=0 // pred_fallthru
    _
  // Predicated region
  $region26: #{artifact_spectra_forward.1} parent=0 // pred_check
    _
  $region27: #{artifact_spectra_forward.1} parent=0 // pred_check_branch
    %727 = sbr.rel (0) target = $region29
  $region28: #{artifact_spectra_forward.1} parent=0 // pred_region
    _
  $region29: #{artifact_spectra_forward.1} parent=0 // pred_fallthru
    _

</llo_original>
